<compile_context>
chip_gen: v5e
topology: v5e:2x2
jax: 0.10.0
libtpu: 0.0.40
codegen_flags: <defaults>
</compile_context>

<pallas_src>
import jax
import jax.numpy as jnp
from jax.experimental import pallas as pl
from jax.experimental.pallas import tpu as pltpu


def aug_encoder_kernel(params_ref, b1_ref, out_ref):
    # params_ref : (D, 4) f32 in VMEM, columns = [mask, W1.T, W2, b2]
    #   col 0: mask                  (D, 1)
    #   col 1: Linear(D,1).weight^T  (D, 1)
    #   col 2: Linear(1,D).weight    (D, 1)
    #   col 3: Linear(1,D).bias      (D, 1)
    # b1_ref  : (1, 1) f32 in SMEM (Linear(D,1).bias)
    # out_ref : (E, 1) f32 in VMEM  -- the module's final output, E <= D
    p = params_ref[...]                                  # (D, 4), already f32
    m = p[:, 0:1]                                        # (D, 1)
    w1 = p[:, 1:2]                                       # (D, 1)
    w2 = p[:, 2:3]                                       # (D, 1)
    b2 = p[:, 3:4]                                       # (D, 1)
    b1 = b1_ref[0, 0]                                    # scalar from SMEM

    # Linear(D, 1) + ReLU: VPU multiply + sublane reduction (no MXU for tiny D).
    h = jnp.maximum(jnp.sum(m * w1, axis=0, keepdims=True) + b1, 0.0)   # (1, 1)

    # Linear(1, D) + ReLU: broadcast fused multiply-add, stays in column form.
    y = jnp.maximum(h * w2 + b2, 0.0)                    # (D, 1)

    # sigmoid on the EUP; static slice to the first E rows -> final (E, 1).
    E = out_ref.shape[0]
    out_ref[...] = jax.nn.sigmoid(y[:E, :])


def pack_aug_encoder_params(mask, w1, b1, w2, b2):
    """One-time packing at parameter-init time (kept off the per-call hot path).

    mask: (D, 1); w1: (1, D); b1: (1,); w2: (D, 1); b2: (D,)
    Returns packed (D, 4) f32 and b1 as (1, 1) f32 (SMEM operand).
    """
    D = mask.shape[0]
    packed = jnp.concatenate(
        [mask.reshape(D, 1), w1.reshape(D, 1), w2.reshape(D, 1), b2.reshape(D, 1)],
        axis=1,
    ).astype(jnp.float32)                                # (D, 4)
    b1_2d = jnp.asarray(b1, dtype=jnp.float32).reshape(1, 1)
    return packed, b1_2d


def aug_encoder_forward(packed, b1_2d, edge_index):
    """Forward pass. packed: (D, 4) f32; b1_2d: (1, 1) f32; edge_index: (2, E)."""
    D = packed.shape[0]
    E = edge_index.shape[1]
    # Same implicit assumption as the PyTorch module (y.T[:E] needs E <= D).
    assert E <= D, f"edge_index.shape[1]={E} must be <= input_dim={D}"

    # Single pallas_call; output is already the module's final (E, 1) shape.
    return pl.pallas_call(
        aug_encoder_kernel,
        out_shape=jax.ShapeDtypeStruct((E, 1), jnp.float32),
        in_specs=[
            pl.BlockSpec(memory_space=pltpu.VMEM),
            pl.BlockSpec(memory_space=pltpu.SMEM),
        ],
        out_specs=pl.BlockSpec(memory_space=pltpu.VMEM),
    )(packed, b1_2d)


if __name__ == "__main__":
    D = 32   # input_dim
    E = 8    # number of edges (edge_index.shape[1])

    key = jax.random.PRNGKey(0)
    k_mask, k_w1, k_b1, k_w2, k_b2, k_edge = jax.random.split(key, 6)

    # Parameters (deterministic init matching the module's shapes)
    mask = jax.random.uniform(k_mask, (D, 1), dtype=jnp.float32)          # torch.rand(D, 1)
    w1 = jax.random.normal(k_w1, (1, D), dtype=jnp.float32) * 0.1         # Linear(D, 1).weight
    b1 = jax.random.normal(k_b1, (1,), dtype=jnp.float32) * 0.1           # Linear(D, 1).bias
    w2 = jax.random.normal(k_w2, (D, 1), dtype=jnp.float32) * 0.1         # Linear(1, D).weight
    b2 = jax.random.normal(k_b2, (D,), dtype=jnp.float32) * 0.1           # Linear(1, D).bias

    # Input: edge_index of shape (2, E) — only its second dim (E) is used,
    # exactly as in the PyTorch module.
    edge_index = jax.random.randint(k_edge, (2, E), 0, 16, dtype=jnp.int32)

    # One-time packing (parameter init time), then a single-kernel forward.
    packed, b1_2d = pack_aug_encoder_params(mask, w1, b1, w2, b2)

    out = aug_encoder_forward(packed, b1_2d, edge_index)
    out = jax.block_until_ready(out)

    # Pure-JAX reference check
    m = mask.T
    h = jnp.maximum(m @ w1.T + b1, 0.0)
    y = jnp.maximum(h @ w2.T + b2, 0.0)
    ref = jax.nn.sigmoid(y.T[:E, :])
    assert out.shape == (E, 1)
    assert jnp.allclose(out, ref, atol=1e-6), "mismatch vs reference"

    print("KERNEL_OK")
</pallas_src>

<mosaic_0001>
module attributes {stable_mosaic.version = 11 : i64} {
  func.func @aug_encoder_kernel(%arg0: memref<32x4xf32, #tpu.memory_space<vmem>>, %arg1: memref<1x1xf32, #tpu.memory_space<smem>>, %arg2: memref<8x1xf32, #tpu.memory_space<vmem>>) attributes {dimension_semantics = [], scalar_prefetch = 0 : i64, scratch_operands = 0 : i64, tpu.core_type = #tpu.core_type<tc>} {
    %c0 = arith.constant 0 : index
    %c0_0 = arith.constant 0 : index
    %0 = vector.load %arg0[%c0, %c0_0] : memref<32x4xf32, #tpu.memory_space<vmem>>, vector<32x4xf32>
    %1 = vector.extract_strided_slice %0 {offsets = [0, 0], sizes = [32, 1], strides = [1, 1]} : vector<32x4xf32> to vector<32x1xf32>
    %2 = vector.extract_strided_slice %0 {offsets = [0, 1], sizes = [32, 1], strides = [1, 1]} : vector<32x4xf32> to vector<32x1xf32>
    %3 = vector.extract_strided_slice %0 {offsets = [0, 2], sizes = [32, 1], strides = [1, 1]} : vector<32x4xf32> to vector<32x1xf32>
    %4 = vector.extract_strided_slice %0 {offsets = [0, 3], sizes = [32, 1], strides = [1, 1]} : vector<32x4xf32> to vector<32x1xf32>
    %c0_1 = arith.constant 0 : index
    %c0_2 = arith.constant 0 : index
    %5 = memref.load %arg1[%c0_1, %c0_2] : memref<1x1xf32, #tpu.memory_space<smem>>
    %6 = arith.mulf %1, %2 : vector<32x1xf32>
    %cst = arith.constant dense<0.000000e+00> : vector<1xf32>
    %7 = vector.multi_reduction <add>, %6, %cst [0] : vector<32x1xf32> to vector<1xf32>
    %8 = vector.shape_cast %7 : vector<1xf32> to vector<1x1xf32>
    %9 = vector.broadcast %5 : f32 to vector<1x1xf32>
    %10 = arith.addf %8, %9 : vector<1x1xf32>
    %cst_3 = arith.constant 0.000000e+00 : f32
    %11 = vector.broadcast %cst_3 : f32 to vector<1x1xf32>
    %12 = arith.maximumf %10, %11 : vector<1x1xf32>
    %13 = vector.broadcast %12 : vector<1x1xf32> to vector<32x1xf32>
    %14 = arith.mulf %13, %3 : vector<32x1xf32>
    %15 = arith.addf %14, %4 : vector<32x1xf32>
    %cst_4 = arith.constant 0.000000e+00 : f32
    %16 = vector.broadcast %cst_4 : f32 to vector<32x1xf32>
    %17 = arith.maximumf %15, %16 : vector<32x1xf32>
    %18 = vector.extract_strided_slice %17 {offsets = [0, 0], sizes = [8, 1], strides = [1, 1]} : vector<32x1xf32> to vector<8x1xf32>
    %19 = arith.negf %18 : vector<8x1xf32>
    %20 = math.exp %19 : vector<8x1xf32>
    %cst_5 = arith.constant 1.000000e+00 : f32
    %21 = vector.broadcast %cst_5 : f32 to vector<8x1xf32>
    %22 = arith.addf %21, %20 : vector<8x1xf32>
    %23 = arith.divf %21, %22 : vector<8x1xf32>
    %c0_6 = arith.constant 0 : index
    %c0_7 = arith.constant 0 : index
    %24 = vector.load %arg2[%c0_6, %c0_7] : memref<8x1xf32, #tpu.memory_space<vmem>>, vector<8x1xf32>
    tpu.vector_store %arg2[%c0_6, %c0_7], %23 {strides = array<i32>} : memref<8x1xf32, #tpu.memory_space<vmem>>, vector<8x1xf32>,
    return
  }
}

</mosaic_0001>

<llo_original>
// kernel: tpu_custom_call.1
$region0: #{tpu_custom_call.1}
  #allocation0 [shape = 'u32[]', space=smem, size = 0x4, offset = 0x4, fixed_abs, tag = 'smem constant byte address 0x4 - core index']
  #allocation1 [shape = 'u32[72,128]{1,0:T(1,128)}', space=vmem, size = 0x9000, scoped, tag = 'internal scratch']
  #allocation2 [shape = 'f32[1,1]{1,0:T(1,128)S(6)}', space=smem, size = 0x200, scoped, tag = 'scoped memory for tpu_custom_call.1']
  %s0 = inlined_call_operand.vmem [shape: f32[32,4], index: 0, kind: input, shape index: {}]
  %s1 = inlined_call_operand.<no memory space> [shape: f32[1,1], index: 1, kind: input, shape index: {}]
  %s2 = inlined_call_operand.vmem [shape: f32[8,1], index: 2, kind: output, shape index: {}]
  %s3 = sld [smem:[#allocation0]]
  $region18: #{tpu_custom_call.1} parent=0
    _
  %s5 = ssub.s32 1, %s3
  %s6 = scalar_select 0, %s5, %s3
  %7 = sst [smem:[#allocation2]] %s1
  // Predicated region
  $region2: #{tpu_custom_call.1} parent=0 // pred_check
    _
  $region3: #{tpu_custom_call.1} parent=0 // pred_check_branch
    %9 = sbr.rel (0) target = $region5
  $region4: #{tpu_custom_call.1} parent=0 // pred_region
    _
  $region5: #{tpu_custom_call.1} parent=0 // pred_fallthru
    _
  // Predicated region
  $region6: #{tpu_custom_call.1} parent=0 // pred_check
    _
  $region7: #{tpu_custom_call.1} parent=0 // pred_check_branch
    %11 = sbr.rel (0) target = $region9
  $region8: #{tpu_custom_call.1} parent=0 // pred_region
    _
  $region9: #{tpu_custom_call.1} parent=0 // pred_fallthru
    _
  %v12 = vld [vmem:[%s0] sm:$0xff]
  %v13 = vld [vmem:[%s0 + $0x8] sm:$0xff]
  %v14 = vld [vmem:[%s0 + $0x10] sm:$0xff]
  %v15 = vld [vmem:[%s0 + $0x18] sm:$0xff]
  %s16 = sld [smem:[#allocation2]]
  %21 = vrot.lane.b32.xlu0 %v12, 127
  %v22 = vpop.permute.xlu0 %21
  %23 = vrot.lane.b32.xlu0 %v13, 127
  %v24 = vpop.permute.xlu0 %23
  %25 = vrot.lane.b32.xlu0 %v14, 127
  %v26 = vpop.permute.xlu0 %25
  %27 = vrot.lane.b32.xlu0 %v15, 127
  %v28 = vpop.permute.xlu0 %27
  %v33 = vmul.f32 %v12, %v22
  %v34 = vmul.f32 %v13, %v24
  %v35 = vmul.f32 %v14, %v26
  %v36 = vmul.f32 %v15, %v28
  %vm37 = vcmask 7168
  %v38 = vsel %vm37, %v33, 0.0
  %v39 = vsel %vm37, %v34, 0.0
  %v40 = vadd.f32 %v38, %v39
  %v41 = vsel %vm37, %v35, 0.0
  %v42 = vadd.f32 %v40, %v41
  %v43 = vsel %vm37, %v36, 0.0
  %v44 = vadd.f32 %v42, %v43
  %v45 = vrot.slane %v44, 4
  %v46 = vadd.f32 %v44, %v45
  %v47 = vrot.slane %v46, 2
  %v48 = vadd.f32 %v46, %v47
  %v49 = vrot.slane %v48, 1
  %v50 = vadd.f32 %v48, %v49
  %v51 = vstv %s16
  %v52 = vadd.f32 %v50, %v51
  %v53 = vmax.f32 %v52, 0.0
  %54 = vrot.lane.b32.xlu0 %v12, 126
  %v55 = vpop.permute.xlu0 %54
  %v57 = vmul.f32 %v53, %v55
  %58 = vrot.lane.b32.xlu0 %v12, 125
  %v59 = vpop.permute.xlu0 %58
  %v61 = vadd.f32 %v57, %v59
  %v62 = vmax.f32 %v61, 0.0
  %v63 = vxor.u32 %v62, 2147483648
  %v64 = vmul.f32 %v63, 1.442695
  %v65 = vpow.pop %v64
  %v66 = vadd.f32 %v65, 1.0
  %v67 = vrcp.pop %v66
  %v68 = vmul.f32 %v66, %v67
  %v69 = vsub.f32 1.0, %v68
  %v70 = vmul.f32 %v67, %v69
  %v71 = vadd.f32 %v67, %v70
  %vm72 = vweird.f32 %v66
  %vm73 = vweird.f32 %v67
  %vm74 = vmor %vm72, %vm73
  %v75 = vsel %vm74, %v67, %v71
  %v76 = vand.u32 2147483647, %v66
  %vm77 = vcmp.eq.f32.partialorder %v76, 8.507059e+37
  %v78 = vand.u32 %v66, 2147483648
  %v79 = vor.u32 1.1754944e-38, %v78
  %v80 = vsel %vm77, %v79, %v75
  %v81 = vmul.f32 1.0, %v80
  %82 = vst.msk [vmem:[%s2] sm:$0xff] %vm37, %v81
  // Predicated region
  $region10: #{tpu_custom_call.1} parent=0 // pred_check
    _
  $region11: #{tpu_custom_call.1} parent=0 // pred_check_branch
    %84 = sbr.rel (0) target = $region13
  $region12: #{tpu_custom_call.1} parent=0 // pred_region
    _
  $region13: #{tpu_custom_call.1} parent=0 // pred_fallthru
    _
  // Predicated region
  $region14: #{tpu_custom_call.1} parent=0 // pred_check
    _
  $region15: #{tpu_custom_call.1} parent=0 // pred_check_branch
    %86 = sbr.rel (0) target = $region17
  $region16: #{tpu_custom_call.1} parent=0 // pred_region
    _
  $region17: #{tpu_custom_call.1} parent=0 // pred_fallthru
    _

</llo_original>
